<compile_context>
chip_gen: v7x
topology: tpu7x:2x2x1
jax: 0.10.0
libtpu: 0.0.40
codegen_flags: <defaults>
</compile_context>

<pallas_src>
import functools

import jax
import jax.numpy as jnp
import numpy as np
from jax.experimental import pallas as pl
from jax.experimental.pallas import tpu as pltpu

# Deterministic "module parameters" (ScaledLossMixin / StableLossMixin defaults).
ALPHA = 0.25
GAMMA = 2.0
EPS = 1e-8     # StableLossMixin.eps
SCALE = 1.0    # ScaledLossMixin.scale


def _focal_block_kernel(x_ref, y_ref, c_ref, out_ref, *,
                        alpha, gamma, K, HW, N, approx, mask_tail):
    """One grid step processes a block of B entries.

    x_ref  : (B, K*HW)   logits (native dtype; cast to f32 per k-slice)
    y_ref  : (B, HW)     shared target map per entry
    c_ref  : (B, K) f32  coefficients = index_mask * w/clamp(sum_k w, eps) / HW
    out_ref: (1, 8, 128) per-block partial sum broadcast over the whole tile
    """
    B = y_ref.shape[0]
    y = y_ref[...].astype(jnp.float32)            # (B, HW)
    c = c_ref[...]                                # (B, K)

    if mask_tail:
        base = pl.program_id(0) * B
        row = jax.lax.broadcasted_iota(jnp.int32, (B, 1), 0) + base
        valid = row < N                           # (B, 1) entry-in-range mask

    # Per-entry terms shared across the K positives (small (B, HW) block).
    q = 1.0 - 2.0 * y                             # one_m_pt = q*p + y
    if alpha >= 0.0:
        ay = (2.0 * alpha - 1.0) * y + (1.0 - alpha)   # == alpha_t

    partial = jnp.float32(0.0)
    for k in range(K):                            # static unroll; K is small
        xk = x_ref[:, k * HW:(k + 1) * HW].astype(jnp.float32)   # (B, HW)
        ck = c[:, k:k + 1]                                       # (B, 1)

        # Single exp on the EUP, shared by the stable BCE and by sigmoid.
        t = jnp.exp(-jnp.abs(xk))                 # exp(-|x|) in (0, 1]
        # Stable BCE-with-logits: max(x,0) - x*y + log1p(exp(-|x|))
        ce = jnp.maximum(xk, 0.0) - xk * y + jnp.log1p(t)
        d = 1.0 + t
        r = pl.reciprocal(d, approx=approx)
        if approx:
            r = r * (2.0 - d * r)                 # one Newton step -> ~f32 accurate
        p = jnp.where(xk >= 0.0, r, t * r)        # sigmoid(x), no second exp

        one_m_pt = q * p + y                      # == 1 - p_t
        if gamma == 2.0:                          # static Python branch
            focal = one_m_pt * one_m_pt
        else:
            # Clamp so tiny negative round-off never NaNs the pow path.
            focal = jnp.power(jnp.maximum(one_m_pt, 0.0), gamma)
        loss = ce * focal
        if alpha >= 0.0:                          # static Python branch
            loss = ay * loss

        weighted = loss * ck                      # coeff folds mask, w-norm, 1/HW
        if mask_tail:
            # Select (not multiply) so garbage/NaN in the OOB tail cannot leak.
            weighted = jnp.where(valid, weighted, 0.0)
        partial = partial + jnp.sum(weighted)

    out_ref[...] = jnp.full((1, 8, 128), partial, dtype=jnp.float32)


def _round_up(v, m):
    return ((v + m - 1) // m) * m


def _vmem_limit_bytes():
    cap = 64 * 1024 * 1024
    try:
        got = int(pltpu.get_tpu_info().vmem_capacity_bytes)
        if got > 0:
            cap = got
    except Exception:
        pass
    if cap <= 64 * 1024 * 1024:                    # v7x-class parts: keep headroom
        return min(int(cap * 0.75), 48 * 1024 * 1024)
    return int(cap * 0.8)                          # 128 MiB parts (v5e/v6e)


def _pick_block_entries(N, K, HW, x_itemsize, y_itemsize, budget_bytes):
    """Entries per grid step (multiple of 8, or == N for a single full block)."""
    HWp = _round_up(HW, 128)
    KHWp = _round_up(K * HW, 128)
    # Double-buffered inputs + ~12 live (B, HW)-sized f32 temporaries (per-k
    # temps are HW-sized, not K*HW-sized, thanks to the in-kernel k loop).
    per_entry = 2 * (KHWp * x_itemsize + HWp * y_itemsize + 128 * 4) + 12 * 4 * HWp
    B = max(1, budget_bytes // per_entry)
    if N >= 16:
        # Keep >= 2 grid blocks so both TensorCores get work on multi-core parts.
        B = min(B, _round_up((N + 1) // 2, 8))
    if B >= N:
        return N                                   # one block == full array
    return max(8, (B // 8) * 8)


def weighted_thing_focal_loss(x, y, y_num, index_mask, instance_num, weights,
                              weight_num, *, alpha=ALPHA, gamma=GAMMA,
                              eps=EPS, scale=SCALE, approx_reciprocal=False):
    # NOTE: like the PyTorch module (int(y_num)), y_num must be concrete here;
    # the empty-positive branch stays in plain JAX.
    if int(y_num) == 0:
        loss = jnp.mean(jax.nn.sigmoid(x.astype(jnp.float32))) + eps
        return loss * y_num

    n, _, h, w = y.shape
    N = n * instance_num
    K = weight_num
    HW = h * w

    # Layout-no-op reshapes; x / y stay in native dtype on the wire (bf16 stays
    # bf16), the kernel casts to f32 after the DMA.
    # TODO(synk): optionally keep the elementwise chain in bf16 on v6e/v7x.
    x2 = jnp.reshape(x, (N, K * HW))
    y2 = jnp.reshape(y, (N, HW))

    # coeff = index_mask * (w / clamp(sum_k w, eps)) / HW    -- (N, K), f32.
    w2 = jnp.reshape(weights, (N, K)).astype(jnp.float32)
    w_norm = w2 / jnp.maximum(jnp.sum(w2, axis=-1, keepdims=True), eps)
    mask = jnp.reshape(index_mask, (N,)).astype(jnp.float32)
    coeff = w_norm * mask[:, None] * (1.0 / HW)

    vmem_limit = _vmem_limit_bytes()
    block_budget = vmem_limit // 2
    B = _pick_block_entries(N, K, HW, x2.dtype.itemsize, y2.dtype.itemsize,
                            block_budget)
    G = pl.cdiv(N, B)
    mask_tail = (N % B) != 0

    kernel = functools.partial(
        _focal_block_kernel, alpha=alpha, gamma=gamma, K=K, HW=HW, N=N,
        approx=approx_reciprocal, mask_tail=mask_tail)

    cost = pl.CostEstimate(
        flops=int(20 * N * K * HW),
        transcendentals=int(3 * N * K * HW),
        bytes_accessed=int(N * K * HW * x2.dtype.itemsize
                           + N * HW * y2.dtype.itemsize
                           + N * K * 4 + G * 8 * 128 * 4),
    )

    out = pl.pallas_call(
        kernel,
        out_shape=jax.ShapeDtypeStruct((G, 8, 128), jnp.float32),
        grid=(G,),
        in_specs=[
            pl.BlockSpec((B, K * HW), lambda i: (i, 0)),
            pl.BlockSpec((B, HW), lambda i: (i, 0)),
            pl.BlockSpec((B, K), lambda i: (i, 0)),
        ],
        out_specs=pl.BlockSpec((1, 8, 128), lambda i: (i, 0, 0)),
        compiler_params=pltpu.CompilerParams(
            dimension_semantics=("parallel",),     # megacore-shardable on v7x
            vmem_limit_bytes=vmem_limit,
        ),
        cost_estimate=cost,
    )(x2, y2, coeff)

    return jnp.sum(out[:, 0, 0]) * scale


def _reference_numpy(x, y, y_num, index_mask, instance_num, weights, weight_num,
                     alpha=ALPHA, gamma=GAMMA, eps=EPS, scale=SCALE):
    x = np.asarray(x).astype(np.float64)
    y = np.asarray(y).astype(np.float64)
    weights = np.asarray(weights).astype(np.float64)
    index_mask = np.asarray(index_mask, bool).reshape(-1)
    if y_num == 0:
        return (1.0 / (1.0 + np.exp(-x))).mean() + eps
    n, _, h, w = y.shape
    xr = x.reshape(n, instance_num, weight_num, h, w).reshape(-1, weight_num, h, w)[index_mask]
    yr = np.broadcast_to(y[:, :, None], (n, instance_num, weight_num, h, w)
                         ).reshape(-1, weight_num, h, w)[index_mask]
    wr = weights.reshape(-1, weight_num)[index_mask]
    wr = wr / np.clip(wr.sum(-1, keepdims=True), eps, None)
    xr = xr.reshape(int(y_num), weight_num, h * w)
    yr = yr.reshape(int(y_num), weight_num, h * w)
    p = 1.0 / (1.0 + np.exp(-xr))
    ce = np.maximum(xr, 0.0) - xr * yr + np.log1p(np.exp(-np.abs(xr)))
    p_t = p * yr + (1.0 - p) * (1.0 - yr)
    loss = ce * (1.0 - p_t) ** gamma
    if alpha >= 0:
        alpha_t = alpha * yr + (1.0 - alpha) * (1.0 - yr)
        loss = alpha_t * loss
    loss = loss.mean(-1) * wr
    return loss.sum() * scale


if __name__ == "__main__":
    root_key = jax.random.PRNGKey(0)

    def make_case(seed, n, instance_num, weight_num, h, w, mask_list, dtype):
        key = jax.random.fold_in(root_key, seed)
        kx, ky, kw = jax.random.split(key, 3)
        x = jax.random.normal(kx, (n, instance_num * weight_num, h, w)).astype(dtype)
        y = (jax.random.uniform(ky, (n, instance_num, h, w)) < 0.3).astype(dtype)
        weights = jax.random.uniform(kw, (n, instance_num, weight_num), jnp.float32)
        index_mask = jnp.array(mask_list, dtype=bool)
        y_num = int(np.asarray(index_mask).sum())
        return x, y, y_num, index_mask, instance_num, weights, weight_num

    # Case 1: n=2, instance_num=4, weight_num=8, h=w=16  (N=8, K=8, HW=256), f32.
    case1 = make_case(0, 2, 4, 8, 16, 16, [1, 0, 1, 1, 0, 1, 0, 1], jnp.float32)
    out1 = jax.block_until_ready(weighted_thing_focal_loss(*case1))
    np.testing.assert_allclose(np.asarray(out1, np.float64),
                               _reference_numpy(*case1), rtol=5e-4, atol=1e-6)

    # Approximate reciprocal + one Newton step: near-full precision fast path.
    out1a = jax.block_until_ready(
        weighted_thing_focal_loss(*case1, approx_reciprocal=True))
    np.testing.assert_allclose(np.asarray(out1a, np.float64),
                               _reference_numpy(*case1), rtol=5e-3, atol=1e-5)

    # Case 2: N=3 (block == full first dim) and HW=144 (unaligned lane slices).
    case2 = make_case(1, 1, 3, 4, 12, 12, [1, 0, 1], jnp.float32)
    out2 = jax.block_until_ready(weighted_thing_focal_loss(*case2))
    np.testing.assert_allclose(np.asarray(out2, np.float64),
                               _reference_numpy(*case2), rtol=5e-4, atol=1e-6)

    # Case 3: bf16 inputs (DMA'd as bf16, cast to f32 inside the kernel).
    case3 = make_case(2, 2, 4, 8, 16, 16, [1, 1, 0, 1, 0, 0, 1, 1], jnp.bfloat16)
    out3 = jax.block_until_ready(weighted_thing_focal_loss(*case3))
    np.testing.assert_allclose(np.asarray(out3, np.float64),
                               _reference_numpy(*case3), rtol=1e-3, atol=1e-5)

    # Case 4: N=18 -> two grid blocks (B=16) with an in-kernel masked tail
    # (exercises cdiv grid + boundary block without any wrapper-side padding).
    mask4 = [1, 0, 1, 1, 0, 1, 0, 1, 1, 1, 0, 0, 1, 0, 1, 1, 0, 1]
    case4 = make_case(3, 2, 9, 4, 8, 8, mask4, jnp.float32)
    out4 = jax.block_until_ready(weighted_thing_focal_loss(*case4))
    np.testing.assert_allclose(np.asarray(out4, np.float64),
                               _reference_numpy(*case4), rtol=5e-4, atol=1e-6)

    # Case 5: y_num == 0 fallback branch (plain JAX, returns 0 like the module).
    x0 = jax.random.normal(jax.random.fold_in(root_key, 4), (1, 8, 8, 8), jnp.float32)
    y0 = jnp.zeros((1, 2, 8, 8), jnp.float32)
    w0 = jnp.ones((1, 2, 4), jnp.float32)
    m0 = jnp.zeros((2,), bool)
    out0 = jax.block_until_ready(weighted_thing_focal_loss(x0, y0, 0, m0, 2, w0, 4))
    assert float(out0) == 0.0

    print("KERNEL_OK")
</pallas_src>

<mosaic_0001>
module attributes {stable_mosaic.version = 11 : i64} {
  func.func @_focal_block_kernel(%arg0: i32, %arg1: memref<8x2048xf32, #tpu.memory_space<vmem>>, %arg2: memref<8x256xf32, #tpu.memory_space<vmem>>, %arg3: memref<8x8xf32, #tpu.memory_space<vmem>>, %arg4: memref<1x8x128xf32, #tpu.memory_space<vmem>>) attributes {dimension_semantics = [#tpu.dimension_semantics<parallel>], iteration_bounds = array<i64: 1>, scalar_prefetch = 0 : i64, scratch_operands = 0 : i64, tpu.core_type = #tpu.core_type<tc>, window_params = [{transform_indices = @transform_0, window_bounds = array<i64: 8, 2048>}, {transform_indices = @transform_1, window_bounds = array<i64: 8, 256>}, {transform_indices = @transform_2, window_bounds = array<i64: 8, 8>}, {transform_indices = @transform_3, window_bounds = array<i64: 1, 8, 128>}]} {
    %c0 = arith.constant 0 : index
    %c0_0 = arith.constant 0 : index
    %0 = vector.load %arg2[%c0, %c0_0] : memref<8x256xf32, #tpu.memory_space<vmem>>, vector<8x256xf32>
    %c0_1 = arith.constant 0 : index
    %c0_2 = arith.constant 0 : index
    %1 = vector.load %arg3[%c0_1, %c0_2] : memref<8x8xf32, #tpu.memory_space<vmem>>, vector<8x8xf32>
    %cst = arith.constant 2.000000e+00 : f32
    %2 = vector.broadcast %cst : f32 to vector<8x256xf32>
    %3 = arith.mulf %2, %0 : vector<8x256xf32>
    %cst_3 = arith.constant 1.000000e+00 : f32
    %4 = vector.broadcast %cst_3 : f32 to vector<8x256xf32>
    %5 = arith.subf %4, %3 : vector<8x256xf32>
    %cst_4 = arith.constant -5.000000e-01 : f32
    %6 = vector.broadcast %cst_4 : f32 to vector<8x256xf32>
    %7 = arith.mulf %6, %0 : vector<8x256xf32>
    %cst_5 = arith.constant 7.500000e-01 : f32
    %8 = vector.broadcast %cst_5 : f32 to vector<8x256xf32>
    %9 = arith.addf %7, %8 : vector<8x256xf32>
    %c0_6 = arith.constant 0 : index
    %c0_7 = arith.constant 0 : index
    %10 = vector.load %arg1[%c0_6, %c0_7] : memref<8x2048xf32, #tpu.memory_space<vmem>>, vector<8x256xf32>
    %11 = vector.extract_strided_slice %1 {offsets = [0, 0], sizes = [8, 1], strides = [1, 1]} : vector<8x8xf32> to vector<8x1xf32>
    %12 = math.absf %10 : vector<8x256xf32>
    %cst_8 = arith.constant 0.000000e+00 : f32
    %13 = vector.broadcast %cst_8 : f32 to vector<8x256xf32>
    %14 = arith.subf %13, %12 : vector<8x256xf32>
    %15 = math.exp %14 : vector<8x256xf32>
    %cst_9 = arith.constant 0.000000e+00 : f32
    %16 = vector.broadcast %cst_9 : f32 to vector<8x256xf32>
    %17 = arith.maximumf %10, %16 : vector<8x256xf32>
    %18 = arith.mulf %10, %0 : vector<8x256xf32>
    %19 = arith.subf %17, %18 : vector<8x256xf32>
    %20 = math.log1p %15 : vector<8x256xf32>
    %21 = arith.addf %19, %20 : vector<8x256xf32>
    %cst_10 = arith.constant 1.000000e+00 : f32
    %22 = vector.broadcast %cst_10 : f32 to vector<8x256xf32>
    %23 = arith.addf %22, %15 : vector<8x256xf32>
    %24 = tpu.reciprocal %23 : vector<8x256xf32> -> vector<8x256xf32>
    %cst_11 = arith.constant 0.000000e+00 : f32
    %25 = vector.broadcast %cst_11 : f32 to vector<8x256xf32>
    %26 = arith.cmpf oge, %10, %25 : vector<8x256xf32>
    %27 = arith.mulf %15, %24 : vector<8x256xf32>
    %28 = arith.select %26, %24, %27 : vector<8x256xi1>, vector<8x256xf32>
    %29 = arith.mulf %5, %28 : vector<8x256xf32>
    %30 = arith.addf %29, %0 : vector<8x256xf32>
    %31 = arith.mulf %30, %30 : vector<8x256xf32>
    %32 = arith.mulf %21, %31 : vector<8x256xf32>
    %33 = arith.mulf %9, %32 : vector<8x256xf32>
    %34 = vector.broadcast %11 : vector<8x1xf32> to vector<8x256xf32>
    %35 = arith.mulf %33, %34 : vector<8x256xf32>
    %36 = vector.shape_cast %35 : vector<8x256xf32> to vector<1x8x256xf32>
    %cst_12 = arith.constant dense<0.000000e+00> : vector<1xf32>
    %37 = vector.multi_reduction <add>, %36, %cst_12 [1, 2] : vector<1x8x256xf32> to vector<1xf32>
    %38 = vector.shape_cast %37 : vector<1xf32> to vector<1x1x1xf32>
    %39 = vector.extract %38[0, 0, 0] : f32 from vector<1x1x1xf32>
    %cst_13 = arith.constant 0.000000e+00 : f32
    %40 = arith.addf %cst_13, %39 : f32
    %c0_14 = arith.constant 0 : index
    %c256 = arith.constant 256 : index
    %41 = vector.load %arg1[%c0_14, %c256] : memref<8x2048xf32, #tpu.memory_space<vmem>>, vector<8x256xf32>
    %42 = vector.extract_strided_slice %1 {offsets = [0, 1], sizes = [8, 1], strides = [1, 1]} : vector<8x8xf32> to vector<8x1xf32>
    %43 = math.absf %41 : vector<8x256xf32>
    %cst_15 = arith.constant 0.000000e+00 : f32
    %44 = vector.broadcast %cst_15 : f32 to vector<8x256xf32>
    %45 = arith.subf %44, %43 : vector<8x256xf32>
    %46 = math.exp %45 : vector<8x256xf32>
    %cst_16 = arith.constant 0.000000e+00 : f32
    %47 = vector.broadcast %cst_16 : f32 to vector<8x256xf32>
    %48 = arith.maximumf %41, %47 : vector<8x256xf32>
    %49 = arith.mulf %41, %0 : vector<8x256xf32>
    %50 = arith.subf %48, %49 : vector<8x256xf32>
    %51 = math.log1p %46 : vector<8x256xf32>
    %52 = arith.addf %50, %51 : vector<8x256xf32>
    %cst_17 = arith.constant 1.000000e+00 : f32
    %53 = vector.broadcast %cst_17 : f32 to vector<8x256xf32>
    %54 = arith.addf %53, %46 : vector<8x256xf32>
    %55 = tpu.reciprocal %54 : vector<8x256xf32> -> vector<8x256xf32>
    %cst_18 = arith.constant 0.000000e+00 : f32
    %56 = vector.broadcast %cst_18 : f32 to vector<8x256xf32>
    %57 = arith.cmpf oge, %41, %56 : vector<8x256xf32>
    %58 = arith.mulf %46, %55 : vector<8x256xf32>
    %59 = arith.select %57, %55, %58 : vector<8x256xi1>, vector<8x256xf32>
    %60 = arith.mulf %5, %59 : vector<8x256xf32>
    %61 = arith.addf %60, %0 : vector<8x256xf32>
    %62 = arith.mulf %61, %61 : vector<8x256xf32>
    %63 = arith.mulf %52, %62 : vector<8x256xf32>
    %64 = arith.mulf %9, %63 : vector<8x256xf32>
    %65 = vector.broadcast %42 : vector<8x1xf32> to vector<8x256xf32>
    %66 = arith.mulf %64, %65 : vector<8x256xf32>
    %67 = vector.shape_cast %66 : vector<8x256xf32> to vector<1x8x256xf32>
    %cst_19 = arith.constant dense<0.000000e+00> : vector<1xf32>
    %68 = vector.multi_reduction <add>, %67, %cst_19 [1, 2] : vector<1x8x256xf32> to vector<1xf32>
    %69 = vector.shape_cast %68 : vector<1xf32> to vector<1x1x1xf32>
    %70 = vector.extract %69[0, 0, 0] : f32 from vector<1x1x1xf32>
    %71 = arith.addf %40, %70 : f32
    %c0_20 = arith.constant 0 : index
    %c512 = arith.constant 512 : index
    %72 = vector.load %arg1[%c0_20, %c512] : memref<8x2048xf32, #tpu.memory_space<vmem>>, vector<8x256xf32>
    %73 = vector.extract_strided_slice %1 {offsets = [0, 2], sizes = [8, 1], strides = [1, 1]} : vector<8x8xf32> to vector<8x1xf32>
    %74 = math.absf %72 : vector<8x256xf32>
    %cst_21 = arith.constant 0.000000e+00 : f32
    %75 = vector.broadcast %cst_21 : f32 to vector<8x256xf32>
    %76 = arith.subf %75, %74 : vector<8x256xf32>
    %77 = math.exp %76 : vector<8x256xf32>
    %cst_22 = arith.constant 0.000000e+00 : f32
    %78 = vector.broadcast %cst_22 : f32 to vector<8x256xf32>
    %79 = arith.maximumf %72, %78 : vector<8x256xf32>
    %80 = arith.mulf %72, %0 : vector<8x256xf32>
    %81 = arith.subf %79, %80 : vector<8x256xf32>
    %82 = math.log1p %77 : vector<8x256xf32>
    %83 = arith.addf %81, %82 : vector<8x256xf32>
    %cst_23 = arith.constant 1.000000e+00 : f32
    %84 = vector.broadcast %cst_23 : f32 to vector<8x256xf32>
    %85 = arith.addf %84, %77 : vector<8x256xf32>
    %86 = tpu.reciprocal %85 : vector<8x256xf32> -> vector<8x256xf32>
    %cst_24 = arith.constant 0.000000e+00 : f32
    %87 = vector.broadcast %cst_24 : f32 to vector<8x256xf32>
    %88 = arith.cmpf oge, %72, %87 : vector<8x256xf32>
    %89 = arith.mulf %77, %86 : vector<8x256xf32>
    %90 = arith.select %88, %86, %89 : vector<8x256xi1>, vector<8x256xf32>
    %91 = arith.mulf %5, %90 : vector<8x256xf32>
    %92 = arith.addf %91, %0 : vector<8x256xf32>
    %93 = arith.mulf %92, %92 : vector<8x256xf32>
    %94 = arith.mulf %83, %93 : vector<8x256xf32>
    %95 = arith.mulf %9, %94 : vector<8x256xf32>
    %96 = vector.broadcast %73 : vector<8x1xf32> to vector<8x256xf32>
    %97 = arith.mulf %95, %96 : vector<8x256xf32>
    %98 = vector.shape_cast %97 : vector<8x256xf32> to vector<1x8x256xf32>
    %cst_25 = arith.constant dense<0.000000e+00> : vector<1xf32>
    %99 = vector.multi_reduction <add>, %98, %cst_25 [1, 2] : vector<1x8x256xf32> to vector<1xf32>
    %100 = vector.shape_cast %99 : vector<1xf32> to vector<1x1x1xf32>
    %101 = vector.extract %100[0, 0, 0] : f32 from vector<1x1x1xf32>
    %102 = arith.addf %71, %101 : f32
    %c0_26 = arith.constant 0 : index
    %c768 = arith.constant 768 : index
    %103 = vector.load %arg1[%c0_26, %c768] : memref<8x2048xf32, #tpu.memory_space<vmem>>, vector<8x256xf32>
    %104 = vector.extract_strided_slice %1 {offsets = [0, 3], sizes = [8, 1], strides = [1, 1]} : vector<8x8xf32> to vector<8x1xf32>
    %105 = math.absf %103 : vector<8x256xf32>
    %cst_27 = arith.constant 0.000000e+00 : f32
    %106 = vector.broadcast %cst_27 : f32 to vector<8x256xf32>
    %107 = arith.subf %106, %105 : vector<8x256xf32>
    %108 = math.exp %107 : vector<8x256xf32>
    %cst_28 = arith.constant 0.000000e+00 : f32
    %109 = vector.broadcast %cst_28 : f32 to vector<8x256xf32>
    %110 = arith.maximumf %103, %109 : vector<8x256xf32>
    %111 = arith.mulf %103, %0 : vector<8x256xf32>
    %112 = arith.subf %110, %111 : vector<8x256xf32>
    %113 = math.log1p %108 : vector<8x256xf32>
    %114 = arith.addf %112, %113 : vector<8x256xf32>
    %cst_29 = arith.constant 1.000000e+00 : f32
    %115 = vector.broadcast %cst_29 : f32 to vector<8x256xf32>
    %116 = arith.addf %115, %108 : vector<8x256xf32>
    %117 = tpu.reciprocal %116 : vector<8x256xf32> -> vector<8x256xf32>
    %cst_30 = arith.constant 0.000000e+00 : f32
    %118 = vector.broadcast %cst_30 : f32 to vector<8x256xf32>
    %119 = arith.cmpf oge, %103, %118 : vector<8x256xf32>
    %120 = arith.mulf %108, %117 : vector<8x256xf32>
    %121 = arith.select %119, %117, %120 : vector<8x256xi1>, vector<8x256xf32>
    %122 = arith.mulf %5, %121 : vector<8x256xf32>
    %123 = arith.addf %122, %0 : vector<8x256xf32>
    %124 = arith.mulf %123, %123 : vector<8x256xf32>
    %125 = arith.mulf %114, %124 : vector<8x256xf32>
    %126 = arith.mulf %9, %125 : vector<8x256xf32>
    %127 = vector.broadcast %104 : vector<8x1xf32> to vector<8x256xf32>
    %128 = arith.mulf %126, %127 : vector<8x256xf32>
    %129 = vector.shape_cast %128 : vector<8x256xf32> to vector<1x8x256xf32>
    %cst_31 = arith.constant dense<0.000000e+00> : vector<1xf32>
    %130 = vector.multi_reduction <add>, %129, %cst_31 [1, 2] : vector<1x8x256xf32> to vector<1xf32>
    %131 = vector.shape_cast %130 : vector<1xf32> to vector<1x1x1xf32>
    %132 = vector.extract %131[0, 0, 0] : f32 from vector<1x1x1xf32>
    %133 = arith.addf %102, %132 : f32
    %c0_32 = arith.constant 0 : index
    %c1024 = arith.constant 1024 : index
    %134 = vector.load %arg1[%c0_32, %c1024] : memref<8x2048xf32, #tpu.memory_space<vmem>>, vector<8x256xf32>
    %135 = vector.extract_strided_slice %1 {offsets = [0, 4], sizes = [8, 1], strides = [1, 1]} : vector<8x8xf32> to vector<8x1xf32>
    %136 = math.absf %134 : vector<8x256xf32>
    %cst_33 = arith.constant 0.000000e+00 : f32
    %137 = vector.broadcast %cst_33 : f32 to vector<8x256xf32>
    %138 = arith.subf %137, %136 : vector<8x256xf32>
    %139 = math.exp %138 : vector<8x256xf32>
    %cst_34 = arith.constant 0.000000e+00 : f32
    %140 = vector.broadcast %cst_34 : f32 to vector<8x256xf32>
    %141 = arith.maximumf %134, %140 : vector<8x256xf32>
    %142 = arith.mulf %134, %0 : vector<8x256xf32>
    %143 = arith.subf %141, %142 : vector<8x256xf32>
    %144 = math.log1p %139 : vector<8x256xf32>
    %145 = arith.addf %143, %144 : vector<8x256xf32>
    %cst_35 = arith.constant 1.000000e+00 : f32
    %146 = vector.broadcast %cst_35 : f32 to vector<8x256xf32>
    %147 = arith.addf %146, %139 : vector<8x256xf32>
    %148 = tpu.reciprocal %147 : vector<8x256xf32> -> vector<8x256xf32>
    %cst_36 = arith.constant 0.000000e+00 : f32
    %149 = vector.broadcast %cst_36 : f32 to vector<8x256xf32>
    %150 = arith.cmpf oge, %134, %149 : vector<8x256xf32>
    %151 = arith.mulf %139, %148 : vector<8x256xf32>
    %152 = arith.select %150, %148, %151 : vector<8x256xi1>, vector<8x256xf32>
    %153 = arith.mulf %5, %152 : vector<8x256xf32>
    %154 = arith.addf %153, %0 : vector<8x256xf32>
    %155 = arith.mulf %154, %154 : vector<8x256xf32>
    %156 = arith.mulf %145, %155 : vector<8x256xf32>
    %157 = arith.mulf %9, %156 : vector<8x256xf32>
    %158 = vector.broadcast %135 : vector<8x1xf32> to vector<8x256xf32>
    %159 = arith.mulf %157, %158 : vector<8x256xf32>
    %160 = vector.shape_cast %159 : vector<8x256xf32> to vector<1x8x256xf32>
    %cst_37 = arith.constant dense<0.000000e+00> : vector<1xf32>
    %161 = vector.multi_reduction <add>, %160, %cst_37 [1, 2] : vector<1x8x256xf32> to vector<1xf32>
    %162 = vector.shape_cast %161 : vector<1xf32> to vector<1x1x1xf32>
    %163 = vector.extract %162[0, 0, 0] : f32 from vector<1x1x1xf32>
    %164 = arith.addf %133, %163 : f32
    %c0_38 = arith.constant 0 : index
    %c1280 = arith.constant 1280 : index
    %165 = vector.load %arg1[%c0_38, %c1280] : memref<8x2048xf32, #tpu.memory_space<vmem>>, vector<8x256xf32>
    %166 = vector.extract_strided_slice %1 {offsets = [0, 5], sizes = [8, 1], strides = [1, 1]} : vector<8x8xf32> to vector<8x1xf32>
    %167 = math.absf %165 : vector<8x256xf32>
    %cst_39 = arith.constant 0.000000e+00 : f32
    %168 = vector.broadcast %cst_39 : f32 to vector<8x256xf32>
    %169 = arith.subf %168, %167 : vector<8x256xf32>
    %170 = math.exp %169 : vector<8x256xf32>
    %cst_40 = arith.constant 0.000000e+00 : f32
    %171 = vector.broadcast %cst_40 : f32 to vector<8x256xf32>
    %172 = arith.maximumf %165, %171 : vector<8x256xf32>
    %173 = arith.mulf %165, %0 : vector<8x256xf32>
    %174 = arith.subf %172, %173 : vector<8x256xf32>
    %175 = math.log1p %170 : vector<8x256xf32>
    %176 = arith.addf %174, %175 : vector<8x256xf32>
    %cst_41 = arith.constant 1.000000e+00 : f32
    %177 = vector.broadcast %cst_41 : f32 to vector<8x256xf32>
    %178 = arith.addf %177, %170 : vector<8x256xf32>
    %179 = tpu.reciprocal %178 : vector<8x256xf32> -> vector<8x256xf32>
    %cst_42 = arith.constant 0.000000e+00 : f32
    %180 = vector.broadcast %cst_42 : f32 to vector<8x256xf32>
    %181 = arith.cmpf oge, %165, %180 : vector<8x256xf32>
    %182 = arith.mulf %170, %179 : vector<8x256xf32>
    %183 = arith.select %181, %179, %182 : vector<8x256xi1>, vector<8x256xf32>
    %184 = arith.mulf %5, %183 : vector<8x256xf32>
    %185 = arith.addf %184, %0 : vector<8x256xf32>
    %186 = arith.mulf %185, %185 : vector<8x256xf32>
    %187 = arith.mulf %176, %186 : vector<8x256xf32>
    %188 = arith.mulf %9, %187 : vector<8x256xf32>
    %189 = vector.broadcast %166 : vector<8x1xf32> to vector<8x256xf32>
    %190 = arith.mulf %188, %189 : vector<8x256xf32>
    %191 = vector.shape_cast %190 : vector<8x256xf32> to vector<1x8x256xf32>
    %cst_43 = arith.constant dense<0.000000e+00> : vector<1xf32>
    %192 = vector.multi_reduction <add>, %191, %cst_43 [1, 2] : vector<1x8x256xf32> to vector<1xf32>
    %193 = vector.shape_cast %192 : vector<1xf32> to vector<1x1x1xf32>
    %194 = vector.extract %193[0, 0, 0] : f32 from vector<1x1x1xf32>
    %195 = arith.addf %164, %194 : f32
    %c0_44 = arith.constant 0 : index
    %c1536 = arith.constant 1536 : index
    %196 = vector.load %arg1[%c0_44, %c1536] : memref<8x2048xf32, #tpu.memory_space<vmem>>, vector<8x256xf32>
    %197 = vector.extract_strided_slice %1 {offsets = [0, 6], sizes = [8, 1], strides = [1, 1]} : vector<8x8xf32> to vector<8x1xf32>
    %198 = math.absf %196 : vector<8x256xf32>
    %cst_45 = arith.constant 0.000000e+00 : f32
    %199 = vector.broadcast %cst_45 : f32 to vector<8x256xf32>
    %200 = arith.subf %199, %198 : vector<8x256xf32>
    %201 = math.exp %200 : vector<8x256xf32>
    %cst_46 = arith.constant 0.000000e+00 : f32
    %202 = vector.broadcast %cst_46 : f32 to vector<8x256xf32>
    %203 = arith.maximumf %196, %202 : vector<8x256xf32>
    %204 = arith.mulf %196, %0 : vector<8x256xf32>
    %205 = arith.subf %203, %204 : vector<8x256xf32>
    %206 = math.log1p %201 : vector<8x256xf32>
    %207 = arith.addf %205, %206 : vector<8x256xf32>
    %cst_47 = arith.constant 1.000000e+00 : f32
    %208 = vector.broadcast %cst_47 : f32 to vector<8x256xf32>
    %209 = arith.addf %208, %201 : vector<8x256xf32>
    %210 = tpu.reciprocal %209 : vector<8x256xf32> -> vector<8x256xf32>
    %cst_48 = arith.constant 0.000000e+00 : f32
    %211 = vector.broadcast %cst_48 : f32 to vector<8x256xf32>
    %212 = arith.cmpf oge, %196, %211 : vector<8x256xf32>
    %213 = arith.mulf %201, %210 : vector<8x256xf32>
    %214 = arith.select %212, %210, %213 : vector<8x256xi1>, vector<8x256xf32>
    %215 = arith.mulf %5, %214 : vector<8x256xf32>
    %216 = arith.addf %215, %0 : vector<8x256xf32>
    %217 = arith.mulf %216, %216 : vector<8x256xf32>
    %218 = arith.mulf %207, %217 : vector<8x256xf32>
    %219 = arith.mulf %9, %218 : vector<8x256xf32>
    %220 = vector.broadcast %197 : vector<8x1xf32> to vector<8x256xf32>
    %221 = arith.mulf %219, %220 : vector<8x256xf32>
    %222 = vector.shape_cast %221 : vector<8x256xf32> to vector<1x8x256xf32>
    %cst_49 = arith.constant dense<0.000000e+00> : vector<1xf32>
    %223 = vector.multi_reduction <add>, %222, %cst_49 [1, 2] : vector<1x8x256xf32> to vector<1xf32>
    %224 = vector.shape_cast %223 : vector<1xf32> to vector<1x1x1xf32>
    %225 = vector.extract %224[0, 0, 0] : f32 from vector<1x1x1xf32>
    %226 = arith.addf %195, %225 : f32
    %c0_50 = arith.constant 0 : index
    %c1792 = arith.constant 1792 : index
    %227 = vector.load %arg1[%c0_50, %c1792] : memref<8x2048xf32, #tpu.memory_space<vmem>>, vector<8x256xf32>
    %228 = vector.extract_strided_slice %1 {offsets = [0, 7], sizes = [8, 1], strides = [1, 1]} : vector<8x8xf32> to vector<8x1xf32>
    %229 = math.absf %227 : vector<8x256xf32>
    %cst_51 = arith.constant 0.000000e+00 : f32
    %230 = vector.broadcast %cst_51 : f32 to vector<8x256xf32>
    %231 = arith.subf %230, %229 : vector<8x256xf32>
    %232 = math.exp %231 : vector<8x256xf32>
    %cst_52 = arith.constant 0.000000e+00 : f32
    %233 = vector.broadcast %cst_52 : f32 to vector<8x256xf32>
    %234 = arith.maximumf %227, %233 : vector<8x256xf32>
    %235 = arith.mulf %227, %0 : vector<8x256xf32>
    %236 = arith.subf %234, %235 : vector<8x256xf32>
    %237 = math.log1p %232 : vector<8x256xf32>
    %238 = arith.addf %236, %237 : vector<8x256xf32>
    %cst_53 = arith.constant 1.000000e+00 : f32
    %239 = vector.broadcast %cst_53 : f32 to vector<8x256xf32>
    %240 = arith.addf %239, %232 : vector<8x256xf32>
    %241 = tpu.reciprocal %240 : vector<8x256xf32> -> vector<8x256xf32>
    %cst_54 = arith.constant 0.000000e+00 : f32
    %242 = vector.broadcast %cst_54 : f32 to vector<8x256xf32>
    %243 = arith.cmpf oge, %227, %242 : vector<8x256xf32>
    %244 = arith.mulf %232, %241 : vector<8x256xf32>
    %245 = arith.select %243, %241, %244 : vector<8x256xi1>, vector<8x256xf32>
    %246 = arith.mulf %5, %245 : vector<8x256xf32>
    %247 = arith.addf %246, %0 : vector<8x256xf32>
    %248 = arith.mulf %247, %247 : vector<8x256xf32>
    %249 = arith.mulf %238, %248 : vector<8x256xf32>
    %250 = arith.mulf %9, %249 : vector<8x256xf32>
    %251 = vector.broadcast %228 : vector<8x1xf32> to vector<8x256xf32>
    %252 = arith.mulf %250, %251 : vector<8x256xf32>
    %253 = vector.shape_cast %252 : vector<8x256xf32> to vector<1x8x256xf32>
    %cst_55 = arith.constant dense<0.000000e+00> : vector<1xf32>
    %254 = vector.multi_reduction <add>, %253, %cst_55 [1, 2] : vector<1x8x256xf32> to vector<1xf32>
    %255 = vector.shape_cast %254 : vector<1xf32> to vector<1x1x1xf32>
    %256 = vector.extract %255[0, 0, 0] : f32 from vector<1x1x1xf32>
    %257 = arith.addf %226, %256 : f32
    %258 = vector.broadcast %257 : f32 to vector<1x8x128xf32>
    %c0_56 = arith.constant 0 : index
    %c0_57 = arith.constant 0 : index
    %c0_58 = arith.constant 0 : index
    %259 = vector.load %arg4[%c0_56, %c0_57, %c0_58] : memref<1x8x128xf32, #tpu.memory_space<vmem>>, vector<1x8x128xf32>
    tpu.vector_store %arg4[%c0_56, %c0_57, %c0_58], %258 {strides = array<i32>} : memref<1x8x128xf32, #tpu.memory_space<vmem>>, vector<1x8x128xf32>,
    return
  }
  func.func @transform_0(%arg0: i32) -> (i32, i32) {
    %c0_i32 = arith.constant 0 : i32
    %c0_i32_0 = arith.constant 0 : i32
    return %arg0, %c0_i32 : i32, i32
  }
  func.func @transform_1(%arg0: i32) -> (i32, i32) {
    %c0_i32 = arith.constant 0 : i32
    %c0_i32_0 = arith.constant 0 : i32
    return %arg0, %c0_i32 : i32, i32
  }
  func.func @transform_2(%arg0: i32) -> (i32, i32) {
    %c0_i32 = arith.constant 0 : i32
    %c0_i32_0 = arith.constant 0 : i32
    return %arg0, %c0_i32 : i32, i32
  }
  func.func @transform_3(%arg0: i32) -> (i32, i32, i32) {
    %c0_i32 = arith.constant 0 : i32
    %c0_i32_0 = arith.constant 0 : i32
    %c0_i32_1 = arith.constant 0 : i32
    return %arg0, %c0_i32, %c0_i32_0 : i32, i32, i32
  }
}

</mosaic_0001>

<llo_original>
// kernel: tpu_custom_call.1
$region0: #{tpu_custom_call.1}
  #allocation0 [shape = 'u32[]', space=smem, size = 0x4, offset = 0x4, fixed_abs, tag = 'smem constant byte address 0x4 - core index']
  #allocation1 [shape = 'u32[144,128]{1,0:T(1,128)}', space=vmem, size = 0x12000, scoped, tag = 'internal scratch']
  %s0 = inlined_call_operand.hbm [shape: f32[8,2048], index: 0, kind: input, shape index: {}]
  %s1 = inlined_call_operand.hbm [shape: f32[8,256], index: 1, kind: input, shape index: {}]
  %s2 = inlined_call_operand.hbm [shape: f32[8,8], index: 2, kind: input, shape index: {}]
  %s3 = inlined_call_operand.hbm [shape: f32[1,8,128], index: 3, kind: output, shape index: {}]
  %s4 = sld [smem:[#allocation0]]
  $region34: #{tpu_custom_call.1} parent=0
    _
  %s6 = ssub.s32 1, %s4
  %s7 = scalar_select 0, %s6, %s4
  $region1: #{tpu_custom_call.1} parent=0
    #allocation2 [shape = 'u8[65536]{0}', space=vmem, size = 0x10000, scoped, tag = 'input window, operand 0, single buffered']
    #allocation3 [shape = 's32[1]{0}', space=sflag, size = 0x4, scoped, tag = 'scoped memory for tpu_custom_call.1']
    #allocation4 [shape = 's32[1]{0}', space=sflag, size = 0x4, scoped, tag = 'scoped memory for tpu_custom_call.1']
    #allocation5 [shape = 'u8[8192]{0}', space=vmem, size = 0x2000, scoped, tag = 'input window, operand 1, single buffered']
    #allocation6 [shape = 's32[1]{0}', space=sflag, size = 0x4, scoped, tag = 'scoped memory for tpu_custom_call.1']
    #allocation7 [shape = 'u8[4096]{0}', space=vmem, size = 0x1000, scoped, tag = 'input window, operand 2, single buffered']
    #allocation8 [shape = 'u8[4096]{0}', space=vmem, size = 0x1000, scoped, tag = 'output window, operand 0, single buffered']
    %8 = vsyncpa [#allocation3], 0
    %9 = vsyncpa [#allocation6], 0
    %10 = vsyncpa [#allocation4], 0
    // Predicated region
    $region2: #{tpu_custom_call.1} parent=1 // pred_check
      _
    $region3: #{tpu_custom_call.1} parent=1 // pred_check_branch
      %12 = sbr.rel (0) target = $region5
    $region4: #{tpu_custom_call.1} parent=1 // pred_region
      %s14 = ssub.s32 2048, 2048
      %15 = vsyncadd [#allocation3], %s14
      %s17 = sshll.u32 [#allocation2], 4
      %s18 = int_to_ptr.vmem [resolvable:$true] %s17
      %20 = dma.hbm_to_vmem [thread:$0]  %s0, 2048, %s18, [#allocation3]
    $region5: #{tpu_custom_call.1} parent=1 // pred_fallthru
      _
    // Predicated region
    $region6: #{tpu_custom_call.1} parent=1 // pred_check
      _
    $region7: #{tpu_custom_call.1} parent=1 // pred_check_branch
      %22 = sbr.rel (0) target = $region9
    $region8: #{tpu_custom_call.1} parent=1 // pred_region
      %s24 = ssub.s32 256, 256
      %25 = vsyncadd [#allocation6], %s24
      %s27 = sshll.u32 [#allocation5], 4
      %s28 = int_to_ptr.vmem [resolvable:$true] %s27
      %30 = dma.hbm_to_vmem [thread:$0]  %s1, 256, %s28, [#allocation6]
    $region9: #{tpu_custom_call.1} parent=1 // pred_fallthru
      _
    // Predicated region
    $region10: #{tpu_custom_call.1} parent=1 // pred_check
      _
    $region11: #{tpu_custom_call.1} parent=1 // pred_check_branch
      %32 = sbr.rel (0) target = $region13
    $region12: #{tpu_custom_call.1} parent=1 // pred_region
      %s34 = ssub.s32 128, 128
      %35 = vsyncadd [#allocation6], %s34
      %s37 = sshll.u32 [#allocation7], 4
      %s38 = int_to_ptr.vmem [resolvable:$true] %s37
      %40 = dma.hbm_to_vmem [thread:$0]  %s2, 128, %s38, [#allocation6]
    $region13: #{tpu_custom_call.1} parent=1 // pred_fallthru
      _
    // Predicated region
    $region14: #{tpu_custom_call.1} parent=1 // pred_check
      _
    $region15: #{tpu_custom_call.1} parent=1 // pred_check_branch
      %42 = sbr.rel (0) target = $region17
    $region16: #{tpu_custom_call.1} parent=1 // pred_region
      %43 = dma.done [#allocation3], 2048
    $region17: #{tpu_custom_call.1} parent=1 // pred_fallthru
      _
    // Predicated region
    $region18: #{tpu_custom_call.1} parent=1 // pred_check
      _
    $region19: #{tpu_custom_call.1} parent=1 // pred_check_branch
      %45 = sbr.rel (0) target = $region21
    $region20: #{tpu_custom_call.1} parent=1 // pred_region
      %46 = dma.done [#allocation6], 256
    $region21: #{tpu_custom_call.1} parent=1 // pred_fallthru
      _
    // Predicated region
    $region22: #{tpu_custom_call.1} parent=1 // pred_check
      _
    $region23: #{tpu_custom_call.1} parent=1 // pred_check_branch
      %48 = sbr.rel (0) target = $region25
    $region24: #{tpu_custom_call.1} parent=1 // pred_region
      %49 = dma.done [#allocation6], 128
    $region25: #{tpu_custom_call.1} parent=1 // pred_fallthru
      _
    %v50 = vld [vmem:[#allocation5] sm:$0xff]
    %v51 = vld [vmem:[#allocation5 + $0x8] sm:$0xff]
    %v52 = vld [vmem:[#allocation7] sm:$0xff]
    %v53 = vmul.f32 %v50, 2.0
    %v54 = vmul.f32 %v51, 2.0
    %v55 = vsub.f32 1.0, %v53
    %v56 = vsub.f32 1.0, %v54
    %v57 = vmul.f32 %v50, -0.5
    %v58 = vmul.f32 %v51, -0.5
    %v59 = vadd.f32 %v57, 0.75
    %v60 = vadd.f32 %v58, 0.75
    %v61 = vld [vmem:[#allocation2] sm:$0xff]
    %v62 = vld [vmem:[#allocation2 + $0x8] sm:$0xff]
    %v63 = vand.u32 2147483647, %v61
    %v64 = vand.u32 2147483647, %v62
    %v65 = vsub.f32 0.0, %v63
    %v66 = vsub.f32 0.0, %v64
    %v67 = vmul.f32 %v65, 1.442695
    %v68 = vpow.pop %v67
    %v69 = vmul.f32 %v66, 1.442695
    %v70 = vpow.pop %v69
    %v71 = vmax.f32 %v61, 0.0
    %v72 = vmax.f32 %v62, 0.0
    %v73 = vmul.f32 %v61, %v50
    %v74 = vmul.f32 %v62, %v51
    %v75 = vsub.f32 %v71, %v73
    %v76 = vsub.f32 %v72, %v74
    %v77 = vadd.f32 %v68, 1.0
    %v78 = vlog2.pop %v77
    %v79 = vmul.f32 %v78, 0.6931472
    %v80 = vmul.f32 -0.5, %v68
    %v81 = vadd.f32 %v80, 1.0
    %v82 = vmul.f32 %v81, %v68
    %v83 = vand.u32 2147483647, %v68
    %vm84 = vcmp.lt.f32.partialorder %v83, 0.0004427343
    %v85 = vsel %vm84, %v82, %v79
    %v86 = vadd.f32 %v70, 1.0
    %v87 = vlog2.pop %v86
    %v88 = vmul.f32 %v87, 0.6931472
    %v89 = vmul.f32 -0.5, %v70
    %v90 = vadd.f32 %v89, 1.0
    %v91 = vmul.f32 %v90, %v70
    %v92 = vand.u32 2147483647, %v70
    %vm93 = vcmp.lt.f32.partialorder %v92, 0.0004427343
    %v94 = vsel %vm93, %v91, %v88
    %v95 = vadd.f32 %v75, %v85
    %v96 = vadd.f32 %v76, %v94
    %v97 = vadd.f32 %v68, 1.0
    %v98 = vadd.f32 %v70, 1.0
    %v99 = vrcp.pop %v97
    %v100 = vrcp.pop %v98
    %vm101 = vcmp.ge.f32.partialorder %v61, 0.0
    %vm102 = vcmp.ge.f32.partialorder %v62, 0.0
    %v103 = vmul.f32 %v68, %v99
    %v104 = vmul.f32 %v70, %v100
    %v105 = vsel %vm101, %v99, %v103
    %v106 = vsel %vm102, %v100, %v104
    %v107 = vmul.f32 %v55, %v105
    %v108 = vmul.f32 %v56, %v106
    %v109 = vadd.f32 %v107, %v50
    %v110 = vadd.f32 %v108, %v51
    %v111 = vmul.f32 %v109, %v109
    %v112 = vmul.f32 %v110, %v110
    %v113 = vmul.f32 %v95, %v111
    %v114 = vmul.f32 %v96, %v112
    %v115 = vmul.f32 %v59, %v113
    %v116 = vmul.f32 %v60, %v114
    %118 = vset.pattern.permute.xlu0 0
    %119 = vperm.xlu0 %118, %v52
    %v120 = vpop.permute.xlu0 %119
    %v122 = vmul.f32 %v115, %v120
    %v123 = vmul.f32 %v116, %v120
    %v124 = vadd.f32 %v122, %v123
    %125 = vadd.xlane.f32.xlu0 %v124
    %v126 = vpop.xlane.xlu0 %125
    %v127 = vrot.slane %v126, 4
    %v128 = vadd.f32 %v126, %v127
    %v129 = vrot.slane %v128, 2
    %v130 = vadd.f32 %v128, %v129
    %v131 = vrot.slane %v130, 1
    %v132 = vadd.f32 %v130, %v131
    %s133 = vtos %v132
    %s134 = sadd.f32 %s133, 0.0
    %v135 = vld [vmem:[#allocation2 + $0x10] sm:$0xff]
    %v136 = vld [vmem:[#allocation2 + $0x18] sm:$0xff]
    %v137 = vand.u32 2147483647, %v135
    %v138 = vand.u32 2147483647, %v136
    %v139 = vsub.f32 0.0, %v137
    %v140 = vsub.f32 0.0, %v138
    %v141 = vmul.f32 %v139, 1.442695
    %v142 = vpow.pop %v141
    %v143 = vmul.f32 %v140, 1.442695
    %v144 = vpow.pop %v143
    %v145 = vmax.f32 %v135, 0.0
    %v146 = vmax.f32 %v136, 0.0
    %v147 = vmul.f32 %v135, %v50
    %v148 = vmul.f32 %v136, %v51
    %v149 = vsub.f32 %v145, %v147
    %v150 = vsub.f32 %v146, %v148
    %v151 = vadd.f32 %v142, 1.0
    %v152 = vlog2.pop %v151
    %v153 = vmul.f32 %v152, 0.6931472
    %v154 = vmul.f32 -0.5, %v142
    %v155 = vadd.f32 %v154, 1.0
    %v156 = vmul.f32 %v155, %v142
    %v157 = vand.u32 2147483647, %v142
    %vm158 = vcmp.lt.f32.partialorder %v157, 0.0004427343
    %v159 = vsel %vm158, %v156, %v153
    %v160 = vadd.f32 %v144, 1.0
    %v161 = vlog2.pop %v160
    %v162 = vmul.f32 %v161, 0.6931472
    %v163 = vmul.f32 -0.5, %v144
    %v164 = vadd.f32 %v163, 1.0
    %v165 = vmul.f32 %v164, %v144
    %v166 = vand.u32 2147483647, %v144
    %vm167 = vcmp.lt.f32.partialorder %v166, 0.0004427343
    %v168 = vsel %vm167, %v165, %v162
    %v169 = vadd.f32 %v149, %v159
    %v170 = vadd.f32 %v150, %v168
    %v171 = vadd.f32 %v142, 1.0
    %v172 = vadd.f32 %v144, 1.0
    %v173 = vrcp.pop %v171
    %v174 = vrcp.pop %v172
    %vm175 = vcmp.ge.f32.partialorder %v135, 0.0
    %vm176 = vcmp.ge.f32.partialorder %v136, 0.0
    %v177 = vmul.f32 %v142, %v173
    %v178 = vmul.f32 %v144, %v174
    %v179 = vsel %vm175, %v173, %v177
    %v180 = vsel %vm176, %v174, %v178
    %v181 = vmul.f32 %v55, %v179
    %v182 = vmul.f32 %v56, %v180
    %v183 = vadd.f32 %v181, %v50
    %v184 = vadd.f32 %v182, %v51
    %v185 = vmul.f32 %v183, %v183
    %v186 = vmul.f32 %v184, %v184
    %v187 = vmul.f32 %v169, %v185
    %v188 = vmul.f32 %v170, %v186
    %v189 = vmul.f32 %v59, %v187
    %v190 = vmul.f32 %v60, %v188
    %191 = vset.pattern.permute.xlu0 1
    %192 = vperm.xlu0 %191, %v52
    %v193 = vpop.permute.xlu0 %192
    %v195 = vmul.f32 %v189, %v193
    %v196 = vmul.f32 %v190, %v193
    %v197 = vadd.f32 %v195, %v196
    %198 = vadd.xlane.f32.xlu0 %v197
    %v199 = vpop.xlane.xlu0 %198
    %v200 = vrot.slane %v199, 4
    %v201 = vadd.f32 %v199, %v200
    %v202 = vrot.slane %v201, 2
    %v203 = vadd.f32 %v201, %v202
    %v204 = vrot.slane %v203, 1
    %v205 = vadd.f32 %v203, %v204
    %s206 = vtos %v205
    %s207 = sadd.f32 %s134, %s206
    %v208 = vld [vmem:[#allocation2 + $0x20] sm:$0xff]
    %v209 = vld [vmem:[#allocation2 + $0x28] sm:$0xff]
    %v210 = vand.u32 2147483647, %v208
    %v211 = vand.u32 2147483647, %v209
    %v212 = vsub.f32 0.0, %v210
    %v213 = vsub.f32 0.0, %v211
    %v214 = vmul.f32 %v212, 1.442695
    %v215 = vpow.pop %v214
    %v216 = vmul.f32 %v213, 1.442695
    %v217 = vpow.pop %v216
    %v218 = vmax.f32 %v208, 0.0
    %v219 = vmax.f32 %v209, 0.0
    %v220 = vmul.f32 %v208, %v50
    %v221 = vmul.f32 %v209, %v51
    %v222 = vsub.f32 %v218, %v220
    %v223 = vsub.f32 %v219, %v221
    %v224 = vadd.f32 %v215, 1.0
    %v225 = vlog2.pop %v224
    %v226 = vmul.f32 %v225, 0.6931472
    %v227 = vmul.f32 -0.5, %v215
    %v228 = vadd.f32 %v227, 1.0
    %v229 = vmul.f32 %v228, %v215
    %v230 = vand.u32 2147483647, %v215
    %vm231 = vcmp.lt.f32.partialorder %v230, 0.0004427343
    %v232 = vsel %vm231, %v229, %v226
    %v233 = vadd.f32 %v217, 1.0
    %v234 = vlog2.pop %v233
    %v235 = vmul.f32 %v234, 0.6931472
    %v236 = vmul.f32 -0.5, %v217
    %v237 = vadd.f32 %v236, 1.0
    %v238 = vmul.f32 %v237, %v217
    %v239 = vand.u32 2147483647, %v217
    %vm240 = vcmp.lt.f32.partialorder %v239, 0.0004427343
    %v241 = vsel %vm240, %v238, %v235
    %v242 = vadd.f32 %v222, %v232
    %v243 = vadd.f32 %v223, %v241
    %v244 = vadd.f32 %v215, 1.0
    %v245 = vadd.f32 %v217, 1.0
    %v246 = vrcp.pop %v244
    %v247 = vrcp.pop %v245
    %vm248 = vcmp.ge.f32.partialorder %v208, 0.0
    %vm249 = vcmp.ge.f32.partialorder %v209, 0.0
    %v250 = vmul.f32 %v215, %v246
    %v251 = vmul.f32 %v217, %v247
    %v252 = vsel %vm248, %v246, %v250
    %v253 = vsel %vm249, %v247, %v251
    %v254 = vmul.f32 %v55, %v252
    %v255 = vmul.f32 %v56, %v253
    %v256 = vadd.f32 %v254, %v50
    %v257 = vadd.f32 %v255, %v51
    %v258 = vmul.f32 %v256, %v256
    %v259 = vmul.f32 %v257, %v257
    %v260 = vmul.f32 %v242, %v258
    %v261 = vmul.f32 %v243, %v259
    %v262 = vmul.f32 %v59, %v260
    %v263 = vmul.f32 %v60, %v261
    %264 = vset.pattern.permute.xlu0 2
    %265 = vperm.xlu0 %264, %v52
    %v266 = vpop.permute.xlu0 %265
    %v268 = vmul.f32 %v262, %v266
    %v269 = vmul.f32 %v263, %v266
    %v270 = vadd.f32 %v268, %v269
    %271 = vadd.xlane.f32.xlu0 %v270
    %v272 = vpop.xlane.xlu0 %271
    %v273 = vrot.slane %v272, 4
    %v274 = vadd.f32 %v272, %v273
    %v275 = vrot.slane %v274, 2
    %v276 = vadd.f32 %v274, %v275
    %v277 = vrot.slane %v276, 1
    %v278 = vadd.f32 %v276, %v277
    %s279 = vtos %v278
    %s280 = sadd.f32 %s207, %s279
    %v281 = vld [vmem:[#allocation2 + $0x30] sm:$0xff]
    %v282 = vld [vmem:[#allocation2 + $0x38] sm:$0xff]
    %v283 = vand.u32 2147483647, %v281
    %v284 = vand.u32 2147483647, %v282
    %v285 = vsub.f32 0.0, %v283
    %v286 = vsub.f32 0.0, %v284
    %v287 = vmul.f32 %v285, 1.442695
    %v288 = vpow.pop %v287
    %v289 = vmul.f32 %v286, 1.442695
    %v290 = vpow.pop %v289
    %v291 = vmax.f32 %v281, 0.0
    %v292 = vmax.f32 %v282, 0.0
    %v293 = vmul.f32 %v281, %v50
    %v294 = vmul.f32 %v282, %v51
    %v295 = vsub.f32 %v291, %v293
    %v296 = vsub.f32 %v292, %v294
    %v297 = vadd.f32 %v288, 1.0
    %v298 = vlog2.pop %v297
    %v299 = vmul.f32 %v298, 0.6931472
    %v300 = vmul.f32 -0.5, %v288
    %v301 = vadd.f32 %v300, 1.0
    %v302 = vmul.f32 %v301, %v288
    %v303 = vand.u32 2147483647, %v288
    %vm304 = vcmp.lt.f32.partialorder %v303, 0.0004427343
    %v305 = vsel %vm304, %v302, %v299
    %v306 = vadd.f32 %v290, 1.0
    %v307 = vlog2.pop %v306
    %v308 = vmul.f32 %v307, 0.6931472
    %v309 = vmul.f32 -0.5, %v290
    %v310 = vadd.f32 %v309, 1.0
    %v311 = vmul.f32 %v310, %v290
    %v312 = vand.u32 2147483647, %v290
    %vm313 = vcmp.lt.f32.partialorder %v312, 0.0004427343
    %v314 = vsel %vm313, %v311, %v308
    %v315 = vadd.f32 %v295, %v305
    %v316 = vadd.f32 %v296, %v314
    %v317 = vadd.f32 %v288, 1.0
    %v318 = vadd.f32 %v290, 1.0
    %v319 = vrcp.pop %v317
    %v320 = vrcp.pop %v318
    %vm321 = vcmp.ge.f32.partialorder %v281, 0.0
    %vm322 = vcmp.ge.f32.partialorder %v282, 0.0
    %v323 = vmul.f32 %v288, %v319
    %v324 = vmul.f32 %v290, %v320
    %v325 = vsel %vm321, %v319, %v323
    %v326 = vsel %vm322, %v320, %v324
    %v327 = vmul.f32 %v55, %v325
    %v328 = vmul.f32 %v56, %v326
    %v329 = vadd.f32 %v327, %v50
    %v330 = vadd.f32 %v328, %v51
    %v331 = vmul.f32 %v329, %v329
    %v332 = vmul.f32 %v330, %v330
    %v333 = vmul.f32 %v315, %v331
    %v334 = vmul.f32 %v316, %v332
    %v335 = vmul.f32 %v59, %v333
    %v336 = vmul.f32 %v60, %v334
    %337 = vset.pattern.permute.xlu0 3
    %338 = vperm.xlu0 %337, %v52
    %v339 = vpop.permute.xlu0 %338
    %v341 = vmul.f32 %v335, %v339
    %v342 = vmul.f32 %v336, %v339
    %v343 = vadd.f32 %v341, %v342
    %344 = vadd.xlane.f32.xlu0 %v343
    %v345 = vpop.xlane.xlu0 %344
    %v346 = vrot.slane %v345, 4
    %v347 = vadd.f32 %v345, %v346
    %v348 = vrot.slane %v347, 2
    %v349 = vadd.f32 %v347, %v348
    %v350 = vrot.slane %v349, 1
    %v351 = vadd.f32 %v349, %v350
    %s352 = vtos %v351
    %s353 = sadd.f32 %s280, %s352
    %v354 = vld [vmem:[#allocation2 + $0x40] sm:$0xff]
    %v355 = vld [vmem:[#allocation2 + $0x48] sm:$0xff]
    %v356 = vand.u32 2147483647, %v354
    %v357 = vand.u32 2147483647, %v355
    %v358 = vsub.f32 0.0, %v356
    %v359 = vsub.f32 0.0, %v357
    %v360 = vmul.f32 %v358, 1.442695
    %v361 = vpow.pop %v360
    %v362 = vmul.f32 %v359, 1.442695
    %v363 = vpow.pop %v362
    %v364 = vmax.f32 %v354, 0.0
    %v365 = vmax.f32 %v355, 0.0
    %v366 = vmul.f32 %v354, %v50
    %v367 = vmul.f32 %v355, %v51
    %v368 = vsub.f32 %v364, %v366
    %v369 = vsub.f32 %v365, %v367
    %v370 = vadd.f32 %v361, 1.0
    %v371 = vlog2.pop %v370
    %v372 = vmul.f32 %v371, 0.6931472
    %v373 = vmul.f32 -0.5, %v361
    %v374 = vadd.f32 %v373, 1.0
    %v375 = vmul.f32 %v374, %v361
    %v376 = vand.u32 2147483647, %v361
    %vm377 = vcmp.lt.f32.partialorder %v376, 0.0004427343
    %v378 = vsel %vm377, %v375, %v372
    %v379 = vadd.f32 %v363, 1.0
    %v380 = vlog2.pop %v379
    %v381 = vmul.f32 %v380, 0.6931472
    %v382 = vmul.f32 -0.5, %v363
    %v383 = vadd.f32 %v382, 1.0
    %v384 = vmul.f32 %v383, %v363
    %v385 = vand.u32 2147483647, %v363
    %vm386 = vcmp.lt.f32.partialorder %v385, 0.0004427343
    %v387 = vsel %vm386, %v384, %v381
    %v388 = vadd.f32 %v368, %v378
    %v389 = vadd.f32 %v369, %v387
    %v390 = vadd.f32 %v361, 1.0
    %v391 = vadd.f32 %v363, 1.0
    %v392 = vrcp.pop %v390
    %v393 = vrcp.pop %v391
    %vm394 = vcmp.ge.f32.partialorder %v354, 0.0
    %vm395 = vcmp.ge.f32.partialorder %v355, 0.0
    %v396 = vmul.f32 %v361, %v392
    %v397 = vmul.f32 %v363, %v393
    %v398 = vsel %vm394, %v392, %v396
    %v399 = vsel %vm395, %v393, %v397
    %v400 = vmul.f32 %v55, %v398
    %v401 = vmul.f32 %v56, %v399
    %v402 = vadd.f32 %v400, %v50
    %v403 = vadd.f32 %v401, %v51
    %v404 = vmul.f32 %v402, %v402
    %v405 = vmul.f32 %v403, %v403
    %v406 = vmul.f32 %v388, %v404
    %v407 = vmul.f32 %v389, %v405
    %v408 = vmul.f32 %v59, %v406
    %v409 = vmul.f32 %v60, %v407
    %410 = vset.pattern.permute.xlu0 4
    %411 = vperm.xlu0 %410, %v52
    %v412 = vpop.permute.xlu0 %411
    %v414 = vmul.f32 %v408, %v412
    %v415 = vmul.f32 %v409, %v412
    %v416 = vadd.f32 %v414, %v415
    %417 = vadd.xlane.f32.xlu0 %v416
    %v418 = vpop.xlane.xlu0 %417
    %v419 = vrot.slane %v418, 4
    %v420 = vadd.f32 %v418, %v419
    %v421 = vrot.slane %v420, 2
    %v422 = vadd.f32 %v420, %v421
    %v423 = vrot.slane %v422, 1
    %v424 = vadd.f32 %v422, %v423
    %s425 = vtos %v424
    %s426 = sadd.f32 %s353, %s425
    %v427 = vld [vmem:[#allocation2 + $0x50] sm:$0xff]
    %v428 = vld [vmem:[#allocation2 + $0x58] sm:$0xff]
    %v429 = vand.u32 2147483647, %v427
    %v430 = vand.u32 2147483647, %v428
    %v431 = vsub.f32 0.0, %v429
    %v432 = vsub.f32 0.0, %v430
    %v433 = vmul.f32 %v431, 1.442695
    %v434 = vpow.pop %v433
    %v435 = vmul.f32 %v432, 1.442695
    %v436 = vpow.pop %v435
    %v437 = vmax.f32 %v427, 0.0
    %v438 = vmax.f32 %v428, 0.0
    %v439 = vmul.f32 %v427, %v50
    %v440 = vmul.f32 %v428, %v51
    %v441 = vsub.f32 %v437, %v439
    %v442 = vsub.f32 %v438, %v440
    %v443 = vadd.f32 %v434, 1.0
    %v444 = vlog2.pop %v443
    %v445 = vmul.f32 %v444, 0.6931472
    %v446 = vmul.f32 -0.5, %v434
    %v447 = vadd.f32 %v446, 1.0
    %v448 = vmul.f32 %v447, %v434
    %v449 = vand.u32 2147483647, %v434
    %vm450 = vcmp.lt.f32.partialorder %v449, 0.0004427343
    %v451 = vsel %vm450, %v448, %v445
    %v452 = vadd.f32 %v436, 1.0
    %v453 = vlog2.pop %v452
    %v454 = vmul.f32 %v453, 0.6931472
    %v455 = vmul.f32 -0.5, %v436
    %v456 = vadd.f32 %v455, 1.0
    %v457 = vmul.f32 %v456, %v436
    %v458 = vand.u32 2147483647, %v436
    %vm459 = vcmp.lt.f32.partialorder %v458, 0.0004427343
    %v460 = vsel %vm459, %v457, %v454
    %v461 = vadd.f32 %v441, %v451
    %v462 = vadd.f32 %v442, %v460
    %v463 = vadd.f32 %v434, 1.0
    %v464 = vadd.f32 %v436, 1.0
    %v465 = vrcp.pop %v463
    %v466 = vrcp.pop %v464
    %vm467 = vcmp.ge.f32.partialorder %v427, 0.0
    %vm468 = vcmp.ge.f32.partialorder %v428, 0.0
    %v469 = vmul.f32 %v434, %v465
    %v470 = vmul.f32 %v436, %v466
    %v471 = vsel %vm467, %v465, %v469
    %v472 = vsel %vm468, %v466, %v470
    %v473 = vmul.f32 %v55, %v471
    %v474 = vmul.f32 %v56, %v472
    %v475 = vadd.f32 %v473, %v50
    %v476 = vadd.f32 %v474, %v51
    %v477 = vmul.f32 %v475, %v475
    %v478 = vmul.f32 %v476, %v476
    %v479 = vmul.f32 %v461, %v477
    %v480 = vmul.f32 %v462, %v478
    %v481 = vmul.f32 %v59, %v479
    %v482 = vmul.f32 %v60, %v480
    %483 = vset.pattern.permute.xlu0 5
    %484 = vperm.xlu0 %483, %v52
    %v485 = vpop.permute.xlu0 %484
    %v487 = vmul.f32 %v481, %v485
    %v488 = vmul.f32 %v482, %v485
    %v489 = vadd.f32 %v487, %v488
    %490 = vadd.xlane.f32.xlu0 %v489
    %v491 = vpop.xlane.xlu0 %490
    %v492 = vrot.slane %v491, 4
    %v493 = vadd.f32 %v491, %v492
    %v494 = vrot.slane %v493, 2
    %v495 = vadd.f32 %v493, %v494
    %v496 = vrot.slane %v495, 1
    %v497 = vadd.f32 %v495, %v496
    %s498 = vtos %v497
    %s499 = sadd.f32 %s426, %s498
    %v500 = vld [vmem:[#allocation2 + $0x60] sm:$0xff]
    %v501 = vld [vmem:[#allocation2 + $0x68] sm:$0xff]
    %v502 = vand.u32 2147483647, %v500
    %v503 = vand.u32 2147483647, %v501
    %v504 = vsub.f32 0.0, %v502
    %v505 = vsub.f32 0.0, %v503
    %v506 = vmul.f32 %v504, 1.442695
    %v507 = vpow.pop %v506
    %v508 = vmul.f32 %v505, 1.442695
    %v509 = vpow.pop %v508
    %v510 = vmax.f32 %v500, 0.0
    %v511 = vmax.f32 %v501, 0.0
    %v512 = vmul.f32 %v500, %v50
    %v513 = vmul.f32 %v501, %v51
    %v514 = vsub.f32 %v510, %v512
    %v515 = vsub.f32 %v511, %v513
    %v516 = vadd.f32 %v507, 1.0
    %v517 = vlog2.pop %v516
    %v518 = vmul.f32 %v517, 0.6931472
    %v519 = vmul.f32 -0.5, %v507
    %v520 = vadd.f32 %v519, 1.0
    %v521 = vmul.f32 %v520, %v507
    %v522 = vand.u32 2147483647, %v507
    %vm523 = vcmp.lt.f32.partialorder %v522, 0.0004427343
    %v524 = vsel %vm523, %v521, %v518
    %v525 = vadd.f32 %v509, 1.0
    %v526 = vlog2.pop %v525
    %v527 = vmul.f32 %v526, 0.6931472
    %v528 = vmul.f32 -0.5, %v509
    %v529 = vadd.f32 %v528, 1.0
    %v530 = vmul.f32 %v529, %v509
    %v531 = vand.u32 2147483647, %v509
    %vm532 = vcmp.lt.f32.partialorder %v531, 0.0004427343
    %v533 = vsel %vm532, %v530, %v527
    %v534 = vadd.f32 %v514, %v524
    %v535 = vadd.f32 %v515, %v533
    %v536 = vadd.f32 %v507, 1.0
    %v537 = vadd.f32 %v509, 1.0
    %v538 = vrcp.pop %v536
    %v539 = vrcp.pop %v537
    %vm540 = vcmp.ge.f32.partialorder %v500, 0.0
    %vm541 = vcmp.ge.f32.partialorder %v501, 0.0
    %v542 = vmul.f32 %v507, %v538
    %v543 = vmul.f32 %v509, %v539
    %v544 = vsel %vm540, %v538, %v542
    %v545 = vsel %vm541, %v539, %v543
    %v546 = vmul.f32 %v55, %v544
    %v547 = vmul.f32 %v56, %v545
    %v548 = vadd.f32 %v546, %v50
    %v549 = vadd.f32 %v547, %v51
    %v550 = vmul.f32 %v548, %v548
    %v551 = vmul.f32 %v549, %v549
    %v552 = vmul.f32 %v534, %v550
    %v553 = vmul.f32 %v535, %v551
    %v554 = vmul.f32 %v59, %v552
    %v555 = vmul.f32 %v60, %v553
    %556 = vset.pattern.permute.xlu0 6
    %557 = vperm.xlu0 %556, %v52
    %v558 = vpop.permute.xlu0 %557
    %v560 = vmul.f32 %v554, %v558
    %v561 = vmul.f32 %v555, %v558
    %v562 = vadd.f32 %v560, %v561
    %563 = vadd.xlane.f32.xlu0 %v562
    %v564 = vpop.xlane.xlu0 %563
    %v565 = vrot.slane %v564, 4
    %v566 = vadd.f32 %v564, %v565
    %v567 = vrot.slane %v566, 2
    %v568 = vadd.f32 %v566, %v567
    %v569 = vrot.slane %v568, 1
    %v570 = vadd.f32 %v568, %v569
    %s571 = vtos %v570
    %s572 = sadd.f32 %s499, %s571
    %v573 = vld [vmem:[#allocation2 + $0x70] sm:$0xff]
    %v574 = vld [vmem:[#allocation2 + $0x78] sm:$0xff]
    %v575 = vand.u32 2147483647, %v573
    %v576 = vand.u32 2147483647, %v574
    %v577 = vsub.f32 0.0, %v575
    %v578 = vsub.f32 0.0, %v576
    %v579 = vmul.f32 %v577, 1.442695
    %v580 = vpow.pop %v579
    %v581 = vmul.f32 %v578, 1.442695
    %v582 = vpow.pop %v581
    %v583 = vmax.f32 %v573, 0.0
    %v584 = vmax.f32 %v574, 0.0
    %v585 = vmul.f32 %v573, %v50
    %v586 = vmul.f32 %v574, %v51
    %v587 = vsub.f32 %v583, %v585
    %v588 = vsub.f32 %v584, %v586
    %v589 = vadd.f32 %v580, 1.0
    %v590 = vlog2.pop %v589
    %v591 = vmul.f32 %v590, 0.6931472
    %v592 = vmul.f32 -0.5, %v580
    %v593 = vadd.f32 %v592, 1.0
    %v594 = vmul.f32 %v593, %v580
    %v595 = vand.u32 2147483647, %v580
    %vm596 = vcmp.lt.f32.partialorder %v595, 0.0004427343
    %v597 = vsel %vm596, %v594, %v591
    %v598 = vadd.f32 %v582, 1.0
    %v599 = vlog2.pop %v598
    %v600 = vmul.f32 %v599, 0.6931472
    %v601 = vmul.f32 -0.5, %v582
    %v602 = vadd.f32 %v601, 1.0
    %v603 = vmul.f32 %v602, %v582
    %v604 = vand.u32 2147483647, %v582
    %vm605 = vcmp.lt.f32.partialorder %v604, 0.0004427343
    %v606 = vsel %vm605, %v603, %v600
    %v607 = vadd.f32 %v587, %v597
    %v608 = vadd.f32 %v588, %v606
    %v609 = vadd.f32 %v580, 1.0
    %v610 = vadd.f32 %v582, 1.0
    %v611 = vrcp.pop %v609
    %v612 = vrcp.pop %v610
    %vm613 = vcmp.ge.f32.partialorder %v573, 0.0
    %vm614 = vcmp.ge.f32.partialorder %v574, 0.0
    %v615 = vmul.f32 %v580, %v611
    %v616 = vmul.f32 %v582, %v612
    %v617 = vsel %vm613, %v611, %v615
    %v618 = vsel %vm614, %v612, %v616
    %v619 = vmul.f32 %v55, %v617
    %v620 = vmul.f32 %v56, %v618
    %v621 = vadd.f32 %v619, %v50
    %v622 = vadd.f32 %v620, %v51
    %v623 = vmul.f32 %v621, %v621
    %v624 = vmul.f32 %v622, %v622
    %v625 = vmul.f32 %v607, %v623
    %v626 = vmul.f32 %v608, %v624
    %v627 = vmul.f32 %v59, %v625
    %v628 = vmul.f32 %v60, %v626
    %629 = vset.pattern.permute.xlu0 7
    %630 = vperm.xlu0 %629, %v52
    %v631 = vpop.permute.xlu0 %630
    %v633 = vmul.f32 %v627, %v631
    %v634 = vmul.f32 %v628, %v631
    %v635 = vadd.f32 %v633, %v634
    %636 = vadd.xlane.f32.xlu0 %v635
    %v637 = vpop.xlane.xlu0 %636
    %v638 = vrot.slane %v637, 4
    %v639 = vadd.f32 %v637, %v638
    %v640 = vrot.slane %v639, 2
    %v641 = vadd.f32 %v639, %v640
    %v642 = vrot.slane %v641, 1
    %v643 = vadd.f32 %v641, %v642
    %s644 = vtos %v643
    %s645 = sadd.f32 %s572, %s644
    %v646 = vstv %s645
    %647 = vst [vmem:[#allocation8] sm:$0xff] %v646
    // Predicated region
    $region26: #{tpu_custom_call.1} parent=1 // pred_check
      _
    $region27: #{tpu_custom_call.1} parent=1 // pred_check_branch
      %649 = sbr.rel (0) target = $region29
    $region28: #{tpu_custom_call.1} parent=1 // pred_region
      %s651 = ssub.s32 128, 128
      %652 = vsyncadd [#allocation4], %s651
      %s654 = sshll.u32 [#allocation8], 4
      %s655 = int_to_ptr.vmem [resolvable:$true] %s654
      %657 = dma.vmem_to_hbm [thread:$0]  %s655, 128, %s3, [#allocation4]
    $region29: #{tpu_custom_call.1} parent=1 // pred_fallthru
      _
    // Predicated region
    $region30: #{tpu_custom_call.1} parent=1 // pred_check
      _
    $region31: #{tpu_custom_call.1} parent=1 // pred_check_branch
      %659 = sbr.rel (0) target = $region33
    $region32: #{tpu_custom_call.1} parent=1 // pred_region
      %660 = dma.done [#allocation4], 128
    $region33: #{tpu_custom_call.1} parent=1 // pred_fallthru
      _
    %661 = vsyncpa [#allocation3], 1
    %662 = vsyncpa [#allocation6], 1
    %663 = vsyncpa [#allocation4], 1

</llo_original>
